<compile_context>
chip_gen: v7x
topology: tpu7x:2x2x1
jax: 0.10.0
libtpu: 0.0.40
codegen_flags: <defaults>
</compile_context>

<pallas_src>
import math

import jax
import jax.numpy as jnp
from jax.experimental import pallas as pl
from jax.experimental.pallas import tpu as pltpu


def _round_up(x, m):
    return ((x + m - 1) // m) * m


def complex_linear_kernel(x_ref, w_ref, b_ref, o_ref):
    # One wide matmul per row tile: (TM, 2*Din) @ (2*Din, 2*Dout), f32 acc on MXU.
    acc = jnp.dot(x_ref[...], w_ref[...], preferred_element_type=jnp.float32)
    # Bias (1, 2*Dout) broadcasts over rows; single lane-dense store.
    o_ref[...] = (acc + b_ref[...]).astype(o_ref.dtype)


def pack_complex_linear_params(w_real, w_imag, b_real, b_imag,
                               dtype=jnp.float32):
    """Pack torch-convention params into the kernel layout (do this ONCE).

    w_*: (Dout, Din), b_*: (Dout,)  ->  w_eff: (2*Din, 2*Dout), b_eff: (1, 2*Dout)

    With Xc = [x_real | x_imag] (features concatenated along the last axis):
      Xc @ w_eff[:, :Dout] = x_real @ wr.T - x_imag @ wi.T      (real, pre-bias)
      Xc @ w_eff[:, Dout:] = x_imag @ wr.T + x_real @ wi.T      (imag, pre-bias)
    """
    wr_t = w_real.T.astype(dtype)                       # (Din, Dout)
    wi_t = w_imag.T.astype(dtype)                       # (Din, Dout)
    w_real_eff = jnp.concatenate([wr_t, -wi_t], axis=0)  # (2*Din, Dout)
    w_imag_eff = jnp.concatenate([wi_t, wr_t], axis=0)   # (2*Din, Dout)
    w_eff = jnp.concatenate([w_real_eff, w_imag_eff], axis=1)  # (2*Din, 2*Dout)

    br = b_real.astype(jnp.float32)
    bi = b_imag.astype(jnp.float32)
    b_eff = jnp.concatenate([br - bi, br + bi]).reshape(1, -1)  # (1, 2*Dout)
    return w_eff, b_eff


def _choose_tm(m, kdim, ndim, budget_bytes=10 << 20):
    """Largest row tile whose double-buffered working set fits the budget.

    budget_bytes (10 MiB) stays under the default scoped-VMEM limit on every
    generation (16 MiB v5e, 32 MiB v6e/v7x) while leaving headroom.
    """
    fixed = kdim * ndim * 4 + ndim * 4            # resident weights + bias
    per_row = 2 * (kdim + ndim) * 4               # double-buffered in + out rows
    tm = (budget_bytes - fixed) // max(per_row, 1)
    tm = max(8, min(int(tm), 1024))
    tm = (tm // 8) * 8
    tm = min(tm, _round_up(m, 8))                 # don't over-allocate tiny M
    return max(tm, 8)


def complex_linear(x, w_eff, b_eff):
    """x: complex64 (..., Din). w_eff/b_eff from pack_complex_linear_params."""
    *lead, din = x.shape
    kdim, ndim = w_eff.shape
    assert kdim == 2 * din, "w_eff must be (2*Din, 2*Dout)"
    dout = ndim // 2
    m = math.prod(lead) if lead else 1

    # Split + concatenate features once: Xc = [x_real | x_imag]  (M, 2*Din).
    xr = jnp.real(x).reshape(m, din)
    xi = jnp.imag(x).reshape(m, din)
    xc = jnp.concatenate([xr, xi], axis=-1).astype(jnp.float32)

    tm = _choose_tm(m, kdim, ndim)
    gm = pl.cdiv(m, tm)

    # Scoped-VMEM hint sized to the actual working set (clamped to safe range).
    vmem_need = (2 * tm * (kdim + ndim) + kdim * ndim + ndim) * 4
    vmem_limit = int(min(max(2 * vmem_need, 16 << 20), 32 << 20))

    cost = pl.CostEstimate(
        flops=2 * m * kdim * ndim,              # == 8 * M * Din * Dout
        transcendentals=0,
        bytes_accessed=4 * (m * kdim + kdim * ndim + ndim + m * ndim),
    )

    out2 = pl.pallas_call(
        complex_linear_kernel,
        out_shape=jax.ShapeDtypeStruct((m, ndim), jnp.float32),
        grid_spec=pltpu.PrefetchScalarGridSpec(
            num_scalar_prefetch=0,
            grid=(gm,),
            in_specs=[
                pl.BlockSpec((tm, kdim), lambda i: (i, 0)),    # Xc row tile
                pl.BlockSpec((kdim, ndim), lambda i: (0, 0)),  # weights resident
                pl.BlockSpec((1, ndim), lambda i: (0, 0)),     # bias resident
            ],
            out_specs=pl.BlockSpec((tm, ndim), lambda i: (i, 0)),
        ),
        compiler_params=pltpu.CompilerParams(
            dimension_semantics=("parallel",),   # shard rows across TCs on v7x
            vmem_limit_bytes=vmem_limit,
        ),
        cost_estimate=cost,
    )(xc, w_eff, b_eff)

    out = jax.lax.complex(out2[:, :dout], out2[:, dout:]).reshape(*lead, dout)
    return out


if __name__ == "__main__":
    batch, seq, input_dim, output_dim = 2, 8, 32, 32

    key = jax.random.PRNGKey(0)
    k_xr, k_xi, k_wr, k_wi, k_br, k_bi = jax.random.split(key, 6)

    # Complex input.
    x_real = jax.random.normal(k_xr, (batch, seq, input_dim), dtype=jnp.float32)
    x_imag = jax.random.normal(k_xi, (batch, seq, input_dim), dtype=jnp.float32)
    x = jax.lax.complex(x_real, x_imag)

    # nn.Linear-convention params: weight (Dout, Din), bias (Dout,).
    bound = 1.0 / math.sqrt(float(input_dim))
    w_real = jax.random.uniform(k_wr, (output_dim, input_dim), jnp.float32, -bound, bound)
    w_imag = jax.random.uniform(k_wi, (output_dim, input_dim), jnp.float32, -bound, bound)
    b_real = jax.random.uniform(k_br, (output_dim,), jnp.float32, -bound, bound)
    b_imag = jax.random.uniform(k_bi, (output_dim,), jnp.float32, -bound, bound)

    # Pack weights/bias ONCE (outside the per-call hot path).
    w_eff, b_eff = pack_complex_linear_params(w_real, w_imag, b_real, b_imag)
    w_eff, b_eff = jax.block_until_ready((w_eff, b_eff))

    out = complex_linear(x, w_eff, b_eff)
    out = jax.block_until_ready(out)

    # Reference check in plain JAX (high-precision matmuls).
    hp = jax.lax.Precision.HIGHEST
    rr = jnp.matmul(x_real, w_real.T, precision=hp)
    ii = jnp.matmul(x_imag, w_imag.T, precision=hp)
    ri = jnp.matmul(x_imag, w_real.T, precision=hp)
    ir = jnp.matmul(x_real, w_imag.T, precision=hp)
    ref_r = (rr + b_real) - (ii + b_imag)
    ref_i = (ri + b_real) + (ir + b_imag)
    ref = jax.lax.complex(ref_r, ref_i)

    assert out.shape == (batch, seq, output_dim)
    assert out.dtype == jnp.complex64
    assert jnp.allclose(out, ref, atol=1e-4, rtol=1e-4)

    print("KERNEL_OK")
</pallas_src>

<mosaic_0001>
module attributes {stable_mosaic.version = 11 : i64} {
  func.func @complex_linear_kernel(%arg0: i32, %arg1: memref<16x64xf32, #tpu.memory_space<vmem>>, %arg2: memref<64x64xf32, #tpu.memory_space<vmem>>, %arg3: memref<1x64xf32, #tpu.memory_space<vmem>>, %arg4: memref<16x64xf32, #tpu.memory_space<vmem>>) attributes {dimension_semantics = [#tpu.dimension_semantics<parallel>], iteration_bounds = array<i64: 1>, scalar_prefetch = 0 : i64, scratch_operands = 0 : i64, tpu.core_type = #tpu.core_type<tc>, window_params = [{transform_indices = @transform_0, window_bounds = array<i64: 16, 64>}, {pipeline_mode = #tpu.pipeline_mode<synchronous>, transform_indices = @transform_1, window_bounds = array<i64: 64, 64>}, {pipeline_mode = #tpu.pipeline_mode<synchronous>, transform_indices = @transform_2, window_bounds = array<i64: 1, 64>}, {transform_indices = @transform_3, window_bounds = array<i64: 16, 64>}]} {
    %c0 = arith.constant 0 : index
    %c0_0 = arith.constant 0 : index
    %0 = vector.load %arg1[%c0, %c0_0] : memref<16x64xf32, #tpu.memory_space<vmem>>, vector<16x64xf32>
    %c0_1 = arith.constant 0 : index
    %c0_2 = arith.constant 0 : index
    %1 = vector.load %arg2[%c0_1, %c0_2] : memref<64x64xf32, #tpu.memory_space<vmem>>, vector<64x64xf32>
    %cst = arith.constant dense<0.000000e+00> : vector<16x64xf32>
    %2 = tpu.matmul %0, %1, %cst {dimension_numbers = #tpu.dot_dimension_numbers<[1], [0], [0], [1], [0, 0, 1, 1], [], []>} : vector<16x64xf32>, vector<64x64xf32>, vector<16x64xf32> -> vector<16x64xf32>
    %c0_3 = arith.constant 0 : index
    %c0_4 = arith.constant 0 : index
    %3 = vector.load %arg3[%c0_3, %c0_4] : memref<1x64xf32, #tpu.memory_space<vmem>>, vector<1x64xf32>
    %4 = vector.broadcast %3 : vector<1x64xf32> to vector<16x64xf32>
    %5 = arith.addf %2, %4 : vector<16x64xf32>
    %c0_5 = arith.constant 0 : index
    %c0_6 = arith.constant 0 : index
    %6 = vector.load %arg4[%c0_5, %c0_6] : memref<16x64xf32, #tpu.memory_space<vmem>>, vector<16x64xf32>
    tpu.vector_store %arg4[%c0_5, %c0_6], %5 {strides = array<i32>} : memref<16x64xf32, #tpu.memory_space<vmem>>, vector<16x64xf32>,
    return
  }
  func.func @transform_0(%arg0: i32) -> (i32, i32) {
    %c0_i32 = arith.constant 0 : i32
    %c0_i32_0 = arith.constant 0 : i32
    return %arg0, %c0_i32 : i32, i32
  }
  func.func @transform_1(%arg0: i32) -> (i32, i32) {
    %c0_i32 = arith.constant 0 : i32
    %c0_i32_0 = arith.constant 0 : i32
    %c0_i32_1 = arith.constant 0 : i32
    return %c0_i32, %c0_i32_0 : i32, i32
  }
  func.func @transform_2(%arg0: i32) -> (i32, i32) {
    %c0_i32 = arith.constant 0 : i32
    %c0_i32_0 = arith.constant 0 : i32
    %c0_i32_1 = arith.constant 0 : i32
    return %c0_i32, %c0_i32_0 : i32, i32
  }
  func.func @transform_3(%arg0: i32) -> (i32, i32) {
    %c0_i32 = arith.constant 0 : i32
    %c0_i32_0 = arith.constant 0 : i32
    return %arg0, %c0_i32 : i32, i32
  }
}

</mosaic_0001>

<llo_original>
// kernel: tpu_custom_call.1
$region0: #{tpu_custom_call.1}
  #allocation0 [shape = 'u32[]', space=smem, size = 0x4, offset = 0x4, fixed_abs, tag = 'smem constant byte address 0x4 - core index']
  #allocation1 [shape = 'u32[144,128]{1,0:T(1,128)}', space=vmem, size = 0x12000, scoped, tag = 'internal scratch']
  %s0 = inlined_call_operand.hbm [shape: f32[16,64], index: 0, kind: input, shape index: {}]
  %s1 = inlined_call_operand.hbm [shape: f32[64,64], index: 1, kind: input, shape index: {}]
  %s2 = inlined_call_operand.vmem [shape: f32[1,64], index: 2, kind: input, shape index: {}]
  %s3 = inlined_call_operand.hbm [shape: f32[16,64], index: 3, kind: output, shape index: {}]
  %s4 = sld [smem:[#allocation0]]
  $region30: #{tpu_custom_call.1} parent=0
    _
  %s6 = ssub.s32 1, %s4
  %s7 = scalar_select 0, %s6, %s4
  $region1: #{tpu_custom_call.1} parent=0
    #allocation2 [shape = 'u8[8192]{0}', space=vmem, size = 0x2000, scoped, tag = 'input window, operand 0, single buffered']
    #allocation3 [shape = 's32[1]{0}', space=sflag, size = 0x4, scoped, tag = 'scoped memory for tpu_custom_call.1']
    #allocation4 [shape = 's32[1]{0}', space=sflag, size = 0x4, scoped, tag = 'scoped memory for tpu_custom_call.1']
    #allocation5 [shape = 'u8[32768]{0}', space=vmem, size = 0x8000, scoped, tag = 'input window, operand 1, single buffered']
    #allocation6 [shape = 's32[1]{0}', space=sflag, size = 0x4, scoped, tag = 'scoped memory for tpu_custom_call.1']
    #allocation7 [shape = 'u8[8192]{0}', space=vmem, size = 0x2000, scoped, tag = 'output window, operand 0, single buffered']
    %8 = vsyncpa [#allocation3], 0
    %9 = vsyncpa [#allocation6], 0
    %10 = vsyncpa [#allocation4], 0
    // Predicated region
    $region2: #{tpu_custom_call.1} parent=1 // pred_check
      _
    $region3: #{tpu_custom_call.1} parent=1 // pred_check_branch
      %12 = sbr.rel (0) target = $region5
    $region4: #{tpu_custom_call.1} parent=1 // pred_region
      %s14 = ssub.s32 256, 256
      %15 = vsyncadd [#allocation3], %s14
      %s16 = sshll.u32 [#allocation2], 4
      %s17 = int_to_ptr.vmem [resolvable:$true] %s16
      %22 = dma.hbm_to_vmem [thread:$0]  %s0, 256, %s17, [#allocation3], 128, 128, 8
    $region5: #{tpu_custom_call.1} parent=1 // pred_fallthru
      _
    // Predicated region
    $region6: #{tpu_custom_call.1} parent=1 // pred_check
      _
    $region7: #{tpu_custom_call.1} parent=1 // pred_check_branch
      %24 = sbr.rel (0) target = $region9
    $region8: #{tpu_custom_call.1} parent=1 // pred_region
      %s26 = ssub.s32 1024, 1024
      %27 = vsyncadd [#allocation6], %s26
      %s28 = sshll.u32 [#allocation5], 4
      %s29 = int_to_ptr.vmem [resolvable:$true] %s28
      %34 = dma.hbm_to_vmem [thread:$0]  %s1, 1024, %s29, [#allocation6], 128, 128, 8
    $region9: #{tpu_custom_call.1} parent=1 // pred_fallthru
      _
    // Predicated region
    $region10: #{tpu_custom_call.1} parent=1 // pred_check
      _
    $region11: #{tpu_custom_call.1} parent=1 // pred_check_branch
      %36 = sbr.rel (0) target = $region13
    $region12: #{tpu_custom_call.1} parent=1 // pred_region
      _
    $region13: #{tpu_custom_call.1} parent=1 // pred_fallthru
      _
    // Predicated region
    $region14: #{tpu_custom_call.1} parent=1 // pred_check
      _
    $region15: #{tpu_custom_call.1} parent=1 // pred_check_branch
      %38 = sbr.rel (0) target = $region17
    $region16: #{tpu_custom_call.1} parent=1 // pred_region
      %39 = dma.done [#allocation3], 256
    $region17: #{tpu_custom_call.1} parent=1 // pred_fallthru
      _
    // Predicated region
    $region18: #{tpu_custom_call.1} parent=1 // pred_check
      _
    $region19: #{tpu_custom_call.1} parent=1 // pred_check_branch
      %41 = sbr.rel (0) target = $region21
    $region20: #{tpu_custom_call.1} parent=1 // pred_region
      %42 = dma.done [#allocation6], 1024
    $region21: #{tpu_custom_call.1} parent=1 // pred_fallthru
      _
    %v43 = vld [vmem:[#allocation2] sm:$0xff]
    %v44 = vld [vmem:[#allocation2 + $0x8] sm:$0xff]
    %v45 = vld [vmem:[#allocation5] sm:$0xff]
    %v46 = vld [vmem:[#allocation5 + $0x8] sm:$0xff]
    %v47 = vld [vmem:[#allocation5 + $0x10] sm:$0xff]
    %v48 = vld [vmem:[#allocation5 + $0x18] sm:$0xff]
    %v49 = vld [vmem:[#allocation5 + $0x20] sm:$0xff]
    %v50 = vld [vmem:[#allocation5 + $0x28] sm:$0xff]
    %v51 = vld [vmem:[#allocation5 + $0x30] sm:$0xff]
    %v52 = vld [vmem:[#allocation5 + $0x38] sm:$0xff]
    %v53 = vld [vmem:[%s2] sm:$0x1]
    %v55 = vlaneseq
    %v56 = vshrl.u32 %v55, 7
    %v57 = vsub.s32 0, %v56
    %v58 = vrot.slane %v53, %v57
    %vm60 = vcmask 523264
    %v62 = vsel %vm60, %v43, 0
    %v65 = vsel %vm60, %v44, 0
    %67 = vmatprep.subr.mxu0 0.0
    %68 = vmatpush1.msra.mxu0 %v45
    %69 = vmatprep.subr.mxu0 0.0
    %70 = vmatpush1.msra.mxu0 %v46
    %71 = vmatprep.subr.mxu0 0.0
    %72 = vmatpush1.msra.mxu0 %v47
    %73 = vmatprep.subr.mxu0 0.0
    %74 = vmatpush1.msra.mxu0 %v48
    %75 = vmatprep.subr.mxu0 0.0
    %76 = vmatpush1.msra.mxu0 %v49
    %77 = vmatprep.subr.mxu0 0.0
    %78 = vmatpush1.msra.mxu0 %v50
    %79 = vmatprep.subr.mxu0 0.0
    %80 = vmatpush1.msra.mxu0 %v51
    %81 = vmatprep.subr.mxu0 0.0
    %82 = vmatpush1.msra.mxu0 %v52
    %83 = vmatprep.subr.mxu0 0.0
    %84 = vmatpush1.msra.mxu0 0.0
    %85 = vmatprep.subr.mxu0 0.0
    %86 = vmatpush1.msra.mxu0 0.0
    %87 = vmatprep.subr.mxu0 0.0
    %88 = vmatpush1.msra.mxu0 0.0
    %89 = vmatprep.subr.mxu0 0.0
    %90 = vmatpush1.msra.mxu0 0.0
    %91 = vmatprep.subr.mxu0 0.0
    %92 = vmatpush1.msra.mxu0 0.0
    %93 = vmatprep.subr.mxu0 0.0
    %94 = vmatpush1.msra.mxu0 0.0
    %95 = vmatprep.subr.mxu0 0.0
    %96 = vmatpush1.msra.mxu0 0.0
    %97 = vmatprep.subr.mxu0 0.0
    %98 = vmatpush1.msra.mxu0 0.0
    %99 = vmatprep.subr.mxu0 0.0
    %100 = vmatpush1.msra.mxu0 0.0
    %101 = vmatprep.subr.mxu0 0.0
    %102 = vmatpush1.msra.mxu0 0.0
    %103 = vmatprep.subr.mxu0 0.0
    %104 = vmatpush1.msra.mxu0 0.0
    %105 = vmatprep.subr.mxu0 0.0
    %106 = vmatpush1.msra.mxu0 0.0
    %107 = vmatprep.subr.mxu0 0.0
    %108 = vmatpush1.msra.mxu0 0.0
    %109 = vmatprep.subr.mxu0 0.0
    %110 = vmatpush1.msra.mxu0 0.0
    %111 = vmatprep.subr.mxu0 0.0
    %112 = vmatpush1.msra.mxu0 0.0
    %113 = vmatprep.subr.mxu0 0.0
    %114 = vmatpush1.msra.mxu0 0.0
    %115 = vmatprep.subr.mxu0 0.0
    %116 = vmatpush1.msra.mxu0 0.0
    %117 = vmatprep.subr.mxu0 0.0
    %118 = vmatpush1.msra.mxu0 0.0
    %119 = vmatprep.subr.mxu0 0.0
    %120 = vmatpush1.msra.mxu0 0.0
    %121 = vmatprep.subr.mxu0 0.0
    %122 = vmatpush1.msra.mxu0 0.0
    %123 = vmatprep.subr.mxu0 0.0
    %124 = vmatpush1.msra.mxu0 0.0
    %125 = vmatprep.subr.mxu0 0.0
    %126 = vmatpush1.msra.mxu0 0.0
    %127 = vmatprep.subr.mxu0 0.0
    %128 = vmatpush1.msra.mxu0 0.0
    %129 = vmatprep.subr.mxu0 0.0
    %130 = vmatpush1.msra.mxu0 0.0
    %131 = vmatprep.mubr.f32.mxu0 0.0
    %132 = vmatmul.mubr.f32.gmra.mrb[0].mxu0 %v62
    %v133 = vpop.f32.mrb[0].mxu0
    %v134 = vadd.f32 %v58, %v133
    %v135 = vpop.f32.mrb[0].mxu0
    %136 = vmatprep.mubr.f32.mxu0 0.0
    %137 = vmatmul.mubr.f32.gmra.mrb[0].mxu0 %v65
    %v138 = vpop.f32.mrb[0].mxu0
    %v139 = vadd.f32 %v58, %v138
    %v140 = vpop.f32.mrb[0].mxu0
    %141 = vdwg.mxu0
    %142 = vst.msk [vmem:[#allocation7] sm:$0xff] %vm60, %v134
    %143 = vst.msk [vmem:[#allocation7 + $0x8] sm:$0xff] %vm60, %v139
    // Predicated region
    $region22: #{tpu_custom_call.1} parent=1 // pred_check
      _
    $region23: #{tpu_custom_call.1} parent=1 // pred_check_branch
      %145 = sbr.rel (0) target = $region25
    $region24: #{tpu_custom_call.1} parent=1 // pred_region
      %s147 = ssub.s32 256, 256
      %148 = vsyncadd [#allocation4], %s147
      %s149 = sshll.u32 [#allocation7], 4
      %s150 = int_to_ptr.vmem [resolvable:$true] %s149
      %155 = dma.vmem_to_hbm [thread:$0]  %s150, 256, %s3, [#allocation4], 128, 128, 8
    $region25: #{tpu_custom_call.1} parent=1 // pred_fallthru
      _
    // Predicated region
    $region26: #{tpu_custom_call.1} parent=1 // pred_check
      _
    $region27: #{tpu_custom_call.1} parent=1 // pred_check_branch
      %157 = sbr.rel (0) target = $region29
    $region28: #{tpu_custom_call.1} parent=1 // pred_region
      %158 = dma.done [#allocation4], 256
    $region29: #{tpu_custom_call.1} parent=1 // pred_fallthru
      _
    %159 = vsyncpa [#allocation3], 1
    %160 = vsyncpa [#allocation6], 1
    %161 = vsyncpa [#allocation4], 1

</llo_original>
